<compile_context>
chip_gen: v7x
topology: tpu7x:2x2x1
jax: 0.10.0
libtpu: 0.0.40
codegen_flags: <defaults>
</compile_context>

<pallas_src>
import functools

import numpy as np
import jax
import jax.numpy as jnp
from jax.experimental import pallas as pl
from jax.experimental.pallas import tpu as pltpu


# -----------------------------------------------------------------------------
# Model configuration (small synthetic shapes)
# -----------------------------------------------------------------------------
B = 2            # batch
C_LIP = 1        # lip channels
HH = 8           # lip height
WW = 8           # lip width
T = 8            # time steps
HIDDEN = 32      # encoder_embed_dim (avhubert)
SPK_DIM = 16     # cfg.model.spk_emb_layer.dim
CONV_HID = 48    # conv decoder hidden channels
N_MEL = 24
ENC_DIM = 32     # cfg.model.decoder.hubert.encoder_output_dim
N_CLUSTER = 16
PRJ_DIM = 32     # hubert projection dim (feeds hubert_decoder)
DEC_HID = 64     # hubert decoder hidden
HEAD_SLAB = 128  # lane-dense fused head output width

IN_FEAT = C_LIP * HH * WW  # flattened lip frame -> 64


def _ceil8(n):
    return ((n + 7) // 8) * 8


# Weight-slab row layout. Every segment starts on an 8-row boundary so all
# in-kernel static sub-views are sublane aligned. One (SLAB_ROWS, 128) DMA.
OFF_FEAT_W  = 0                                   # (IN_FEAT, HIDDEN)
OFF_FEAT_B  = OFF_FEAT_W  + _ceil8(IN_FEAT)       # (1, HIDDEN)
OFF_SPK_WF  = OFF_FEAT_B  + 8                     # (HIDDEN, HIDDEN)  acts on feature
OFF_SPK_WS  = OFF_SPK_WF  + _ceil8(HIDDEN)        # (SPK_DIM, HIDDEN) acts on spk_emb
OFF_SPK_B   = OFF_SPK_WS  + _ceil8(SPK_DIM)       # (1, HIDDEN)
OFF_CONV_W  = OFF_SPK_B   + 8                     # (3*HIDDEN, CONV_HID)
OFF_CONV_B  = OFF_CONV_W  + _ceil8(3 * HIDDEN)    # (1, CONV_HID)
OFF_CHEAD_W = OFF_CONV_B  + 8                     # (CONV_HID, 128) [prj|enc|mel|clu|0]
OFF_CHEAD_B = OFF_CHEAD_W + _ceil8(CONV_HID)      # (1, 128)
OFF_DEC_W   = OFF_CHEAD_B + 8                     # (PRJ_DIM, DEC_HID)
OFF_DEC_B   = OFF_DEC_W   + _ceil8(PRJ_DIM)       # (1, DEC_HID)
OFF_DHEAD_W = OFF_DEC_B   + 8                     # (DEC_HID, 128) [reg|cls|mel|0]
OFF_DHEAD_B = OFF_DHEAD_W + _ceil8(DEC_HID)       # (1, 128)
SLAB_ROWS   = OFF_DHEAD_B + 8                     # 400


# -----------------------------------------------------------------------------
# Single fused Pallas kernel: whole forward pass
# -----------------------------------------------------------------------------
def _fused_forward_kernel(lip_ref, spk_ref, w_ref, out_ref, *, batch, tsteps):
    f32 = jnp.float32
    bt = batch * tsteps

    def w(off, rows, cols):
        # static, sublane-aligned sub-view of the packed weight slab
        return w_ref[off:off + rows, 0:cols]

    # ---- feature extraction stand-in (per-frame linear) ----------------------
    feat = (jnp.dot(lip_ref[...], w(OFF_FEAT_W, IN_FEAT, HIDDEN),
                    preferred_element_type=f32)
            + w(OFF_FEAT_B, 1, HIDDEN))                                    # (BT, H)

    # ---- spk_emb_layer: Linear([feature|spk]) == feat@Wf + spk@Ws + b --------
    spk_part = jnp.dot(spk_ref[...], w(OFF_SPK_WS, SPK_DIM, HIDDEN),
                       preferred_element_type=f32)                         # (B, H)
    # expand each batch row over its T frames with a sublane broadcast
    spk_full = jnp.concatenate(
        [jnp.broadcast_to(spk_part[b:b + 1, :], (tsteps, HIDDEN))
         for b in range(batch)], axis=0)                                   # (BT, H)
    feature = (jnp.dot(feat, w(OFF_SPK_WF, HIDDEN, HIDDEN),
                       preferred_element_type=f32)
               + spk_full + w(OFF_SPK_B, 1, HIDDEN))                       # (BT, H)

    # ---- temporal conv k=3, pad=1: XLU roll + VPU mask, one fused K=96 dot ---
    t_idx = jax.lax.broadcasted_iota(jnp.int32, (bt, HIDDEN), 0) % tsteps
    x_m1 = jnp.where(t_idx == 0, 0.0,
                     pltpu.roll(feature, 1, 0))          # row t-1, zero at t==0
    x_p1 = jnp.where(t_idx == tsteps - 1, 0.0,
                     pltpu.roll(feature, bt - 1, 0))     # row t+1, zero at t==T-1
    conv_in = jnp.concatenate([x_m1, feature, x_p1], axis=1)               # (BT, 3H)
    conv_hid = jnp.maximum(
        jnp.dot(conv_in, w(OFF_CONV_W, 3 * HIDDEN, CONV_HID),
                preferred_element_type=f32)
        + w(OFF_CONV_B, 1, CONV_HID), 0.0)                                 # (BT, CH)

    # ---- 4 conv-decoder heads fused into one lane-dense 128-wide matmul ------
    conv_heads = (jnp.dot(conv_hid, w(OFF_CHEAD_W, CONV_HID, HEAD_SLAB),
                          preferred_element_type=f32)
                  + w(OFF_CHEAD_B, 1, HEAD_SLAB))                          # (BT, 128)

    # ---- HuBERT decoder: prj slice -> linear+ReLU -> 3 fused heads -----------
    prj = conv_heads[:, 0:PRJ_DIM]                                         # (BT, PRJ)
    dec_hid = jnp.maximum(
        jnp.dot(prj, w(OFF_DEC_W, PRJ_DIM, DEC_HID), preferred_element_type=f32)
        + w(OFF_DEC_B, 1, DEC_HID), 0.0)                                   # (BT, DH)
    dec_heads = (jnp.dot(dec_hid, w(OFF_DHEAD_W, DEC_HID, HEAD_SLAB),
                         preferred_element_type=f32)
                 + w(OFF_DHEAD_B, 1, HEAD_SLAB))                           # (BT, 128)

    # ---- single lane-dense (BT, 256) output slab ------------------------------
    out_ref[...] = jnp.concatenate([conv_heads, dec_heads],
                                   axis=1).astype(out_ref.dtype)


def fused_forward_pallas(lip_flat, spk_emb, w_slab):
    bt, in_feat = lip_flat.shape
    batch = spk_emb.shape[0]
    tsteps = bt // batch
    out_w = 2 * HEAD_SLAB

    flops = (2 * bt * (in_feat * HIDDEN + HIDDEN * HIDDEN
                       + 3 * HIDDEN * CONV_HID + CONV_HID * HEAD_SLAB
                       + PRJ_DIM * DEC_HID + DEC_HID * HEAD_SLAB)
             + 2 * batch * SPK_DIM * HIDDEN)
    bytes_accessed = 4 * (lip_flat.size + spk_emb.size + w_slab.size + bt * out_w)

    return pl.pallas_call(
        functools.partial(_fused_forward_kernel, batch=batch, tsteps=tsteps),
        grid=(1,),
        out_shape=jax.ShapeDtypeStruct((bt, out_w), jnp.float32),
        in_specs=[
            pl.BlockSpec((bt, in_feat), lambda i: (0, 0)),
            pl.BlockSpec((batch, SPK_DIM), lambda i: (0, 0)),
            pl.BlockSpec((SLAB_ROWS, HEAD_SLAB), lambda i: (0, 0)),
        ],
        out_specs=pl.BlockSpec((bt, out_w), lambda i: (0, 0)),
        compiler_params=pltpu.CompilerParams(dimension_semantics=("arbitrary",)),
        cost_estimate=pl.CostEstimate(flops=int(flops), transcendentals=0,
                                      bytes_accessed=int(bytes_accessed)),
    )(lip_flat, spk_emb, w_slab)


# -----------------------------------------------------------------------------
# Deterministic parameters + one-time packing into the weight slab
# -----------------------------------------------------------------------------
def init_params():
    key = jax.random.PRNGKey(42)
    ks = jax.random.split(key, 16)
    s = 0.02

    def lin(k, din, dout):
        kw, kb = jax.random.split(k)
        return (s * jax.random.normal(kw, (din, dout), jnp.float32),
                s * jax.random.normal(kb, (dout,), jnp.float32))

    p = {}
    # TODO(synk): avhubert backbone is an external pretrained model; replaced by
    # a per-frame linear feature projection with the same (B, T, C) output.
    p["feat_w"], p["feat_b"] = lin(ks[0], IN_FEAT, HIDDEN)
    # spk_emb_layer: Linear(hidden + spk_dim, hidden)
    p["spk_w"], p["spk_b"] = lin(ks[1], HIDDEN + SPK_DIM, HIDDEN)
    # ConvDecoderHuBERT stand-in: conv1d(k=3, pad=1) + ReLU, then 4 linear heads
    kw, kb = jax.random.split(ks[2])
    p["conv_w"] = s * jax.random.normal(kw, (3, HIDDEN, CONV_HID), jnp.float32)
    p["conv_b"] = s * jax.random.normal(kb, (CONV_HID,), jnp.float32)
    p["mel_w"], p["mel_b"] = lin(ks[3], CONV_HID, N_MEL)
    p["enc_w"], p["enc_b"] = lin(ks[4], CONV_HID, ENC_DIM)
    p["clu_w"], p["clu_b"] = lin(ks[5], CONV_HID, N_CLUSTER)
    p["prj_w"], p["prj_b"] = lin(ks[6], CONV_HID, PRJ_DIM)
    # HuBERTDecoder stand-in: linear + ReLU, then 3 heads (reg, cls, mel)
    p["dec_w"], p["dec_b"] = lin(ks[7], PRJ_DIM, DEC_HID)
    p["reg_w"], p["reg_b"] = lin(ks[8], DEC_HID, ENC_DIM)
    p["cls_w"], p["cls_b"] = lin(ks[9], DEC_HID, N_CLUSTER)
    p["dmel_w"], p["dmel_b"] = lin(ks[10], DEC_HID, N_MEL)
    return p


def pack_weight_slab(p):
    """Pack every weight/bias into one (SLAB_ROWS, 128) f32 array (one DMA)."""
    slab = np.zeros((SLAB_ROWS, HEAD_SLAB), np.float32)

    def put(off, arr):
        a = np.asarray(arr, np.float32)
        if a.ndim == 1:
            a = a[None, :]
        slab[off:off + a.shape[0], :a.shape[1]] = a

    put(OFF_FEAT_W, p["feat_w"])
    put(OFF_FEAT_B, p["feat_b"])
    spk_w = np.asarray(p["spk_w"], np.float32)
    put(OFF_SPK_WF, spk_w[:HIDDEN])         # rows acting on the ssl feature
    put(OFF_SPK_WS, spk_w[HIDDEN:])         # rows acting on spk_emb
    put(OFF_SPK_B, p["spk_b"])
    put(OFF_CONV_W, np.asarray(p["conv_w"], np.float32).reshape(3 * HIDDEN, CONV_HID))
    put(OFF_CONV_B, p["conv_b"])
    chead_w = np.concatenate([np.asarray(p["prj_w"]), np.asarray(p["enc_w"]),
                              np.asarray(p["mel_w"]), np.asarray(p["clu_w"])], axis=1)
    chead_b = np.concatenate([np.asarray(p["prj_b"]), np.asarray(p["enc_b"]),
                              np.asarray(p["mel_b"]), np.asarray(p["clu_b"])], axis=0)
    put(OFF_CHEAD_W, chead_w)
    put(OFF_CHEAD_B, chead_b)
    put(OFF_DEC_W, p["dec_w"])
    put(OFF_DEC_B, p["dec_b"])
    dhead_w = np.concatenate([np.asarray(p["reg_w"]), np.asarray(p["cls_w"]),
                              np.asarray(p["dmel_w"])], axis=1)
    dhead_b = np.concatenate([np.asarray(p["reg_b"]), np.asarray(p["cls_b"]),
                              np.asarray(p["dmel_b"])], axis=0)
    put(OFF_DHEAD_W, dhead_w)
    put(OFF_DHEAD_B, dhead_b)
    return jnp.asarray(slab)


# -----------------------------------------------------------------------------
# Forward pass (mirrors BaseHuBERTModel.forward, ssl_type='avhubert',
# spk_emb_layer.use=True, eval mode so dropout / input masking are identity)
# -----------------------------------------------------------------------------
def base_hubert_forward(w_slab, lip, audio, spk_emb, feature_hubert_prj,
                        padding_mask_lip, padding_mask_feature_hubert):
    del audio, padding_mask_lip, padding_mask_feature_hubert
    # TODO(synk): padding masks are unused; the fixed-T eval stand-in assumes
    # full-length sequences, so the k=3 temporal conv never sees padded frames.

    # lip: (B, C, H, W, T) -> permute(0,1,4,2,3) -> (B, C, T, H, W) -> per-frame flat
    lip = jnp.transpose(lip, (0, 1, 4, 2, 3))
    Bb, Cc, Tt, Hh, Ww = lip.shape
    BT = Bb * Tt
    lip_flat = jnp.transpose(lip, (0, 2, 1, 3, 4)).reshape(BT, Cc * Hh * Ww)

    # --- single fused Pallas kernel (3 input DMAs, 1 output DMA) --------------
    slab = fused_forward_pallas(lip_flat, spk_emb, w_slab)
    conv_slab = slab[:, :HEAD_SLAB]
    dec_slab = slab[:, HEAD_SLAB:]

    # --- slice the lane-dense slabs back into named heads ---------------------
    off = 0
    prj_2d = conv_slab[:, off:off + PRJ_DIM]; off += PRJ_DIM
    enc_2d = conv_slab[:, off:off + ENC_DIM]; off += ENC_DIM
    mel_2d = conv_slab[:, off:off + N_MEL]; off += N_MEL
    clu_2d = conv_slab[:, off:off + N_CLUSTER]

    # PyTorch ConvDecoder outputs are channels-first (B, C, T) — keep semantics
    conv_output_hubert_prj = jnp.transpose(prj_2d.reshape(Bb, Tt, PRJ_DIM), (0, 2, 1))
    conv_output_hubert_encoder = jnp.transpose(enc_2d.reshape(Bb, Tt, ENC_DIM), (0, 2, 1))
    conv_output_mel = jnp.transpose(mel_2d.reshape(Bb, Tt, N_MEL), (0, 2, 1))
    conv_output_hubert_cluster = jnp.transpose(clu_2d.reshape(Bb, Tt, N_CLUSTER), (0, 2, 1))

    off = 0
    hubert_output_reg = dec_slab[:, off:off + ENC_DIM].reshape(Bb, Tt, ENC_DIM); off += ENC_DIM
    hubert_output_cls = dec_slab[:, off:off + N_CLUSTER].reshape(Bb, Tt, N_CLUSTER); off += N_CLUSTER
    hubert_output_mel = dec_slab[:, off:off + N_MEL].reshape(Bb, Tt, N_MEL)

    # eval mode: no random masking -> mask_indices all True,
    # hubert_decoder_input == conv_output_hubert_prj (already consumed in-kernel).
    # TODO(synk): compute_mask_indices uses host-side numpy RNG (training only);
    # not expressible as a TPU kernel, eval path (all-ones mask) implemented.
    mask_indices = jnp.ones(
        (feature_hubert_prj.shape[0], feature_hubert_prj.shape[2]), dtype=jnp.bool_)

    return (conv_output_mel, conv_output_hubert_prj, conv_output_hubert_encoder,
            conv_output_hubert_cluster, hubert_output_reg, hubert_output_cls,
            hubert_output_mel, mask_indices)


# -----------------------------------------------------------------------------
# Main
# -----------------------------------------------------------------------------
if __name__ == "__main__":
    key = jax.random.PRNGKey(0)
    k_lip, k_spk, k_prj = jax.random.split(key, 3)

    lip = jax.random.normal(k_lip, (B, C_LIP, HH, WW, T), jnp.float32)           # (B, C, H, W, T)
    spk_emb = jax.random.normal(k_spk, (B, SPK_DIM), jnp.float32)                # (B, C_spk)
    feature_hubert_prj = jax.random.normal(k_prj, (B, PRJ_DIM, T), jnp.float32)  # (B, C, T)
    padding_mask_lip = jnp.zeros((B, T), dtype=jnp.bool_)
    padding_mask_feature_hubert = jnp.zeros((B, T), dtype=jnp.bool_)

    params = init_params()
    w_slab = pack_weight_slab(params)   # single (400, 128) weight/bias DMA slab

    forward = jax.jit(base_hubert_forward)
    outputs = forward(w_slab, lip, None, spk_emb, feature_hubert_prj,
                      padding_mask_lip, padding_mask_feature_hubert)
    outputs = jax.block_until_ready(outputs)

    expected_shapes = [
        (B, N_MEL, T),        # conv_output_mel
        (B, PRJ_DIM, T),      # conv_output_hubert_prj
        (B, ENC_DIM, T),      # conv_output_hubert_encoder
        (B, N_CLUSTER, T),    # conv_output_hubert_cluster
        (B, T, ENC_DIM),      # hubert_output_reg
        (B, T, N_CLUSTER),    # hubert_output_cls
        (B, T, N_MEL),        # hubert_output_mel
        (B, T),               # mask_indices
    ]
    for o, es in zip(outputs, expected_shapes):
        assert o.shape == es, (o.shape, es)
        assert bool(jnp.all(jnp.isfinite(o.astype(jnp.float32))))

    print("KERNEL_OK")
</pallas_src>

<mosaic_0001>
module attributes {stable_mosaic.version = 11 : i64} {
  func.func @_fused_forward_kernel(%arg0: i32, %arg1: memref<16x64xf32, #tpu.memory_space<vmem>>, %arg2: memref<2x16xf32, #tpu.memory_space<vmem>>, %arg3: memref<400x128xf32, #tpu.memory_space<vmem>>, %arg4: memref<16x256xf32, #tpu.memory_space<vmem>>) attributes {dimension_semantics = [#tpu.dimension_semantics<arbitrary>], iteration_bounds = array<i64: 1>, scalar_prefetch = 0 : i64, scratch_operands = 0 : i64, tpu.core_type = #tpu.core_type<tc>, window_params = [{pipeline_mode = #tpu.pipeline_mode<synchronous>, transform_indices = @transform_0, window_bounds = array<i64: 16, 64>}, {pipeline_mode = #tpu.pipeline_mode<synchronous>, transform_indices = @transform_1, window_bounds = array<i64: 2, 16>}, {pipeline_mode = #tpu.pipeline_mode<synchronous>, transform_indices = @transform_2, window_bounds = array<i64: 400, 128>}, {pipeline_mode = #tpu.pipeline_mode<synchronous>, transform_indices = @transform_3, window_bounds = array<i64: 16, 256>}]} {
    %c0 = arith.constant 0 : index
    %c0_0 = arith.constant 0 : index
    %0 = vector.load %arg1[%c0, %c0_0] : memref<16x64xf32, #tpu.memory_space<vmem>>, vector<16x64xf32>
    %c0_1 = arith.constant 0 : index
    %c0_2 = arith.constant 0 : index
    %1 = vector.load %arg3[%c0_1, %c0_2] : memref<400x128xf32, #tpu.memory_space<vmem>>, vector<64x32xf32>
    %cst = arith.constant dense<0.000000e+00> : vector<16x32xf32>
    %2 = tpu.matmul %0, %1, %cst {dimension_numbers = #tpu.dot_dimension_numbers<[1], [0], [0], [1], [0, 0, 1, 1], [], []>} : vector<16x64xf32>, vector<64x32xf32>, vector<16x32xf32> -> vector<16x32xf32>
    %c64 = arith.constant 64 : index
    %c0_3 = arith.constant 0 : index
    %3 = vector.load %arg3[%c64, %c0_3] : memref<400x128xf32, #tpu.memory_space<vmem>>, vector<1x32xf32>
    %4 = vector.broadcast %3 : vector<1x32xf32> to vector<16x32xf32>
    %5 = arith.addf %2, %4 : vector<16x32xf32>
    %c0_4 = arith.constant 0 : index
    %c0_5 = arith.constant 0 : index
    %6 = vector.load %arg2[%c0_4, %c0_5] : memref<2x16xf32, #tpu.memory_space<vmem>>, vector<2x16xf32>
    %c104 = arith.constant 104 : index
    %c0_6 = arith.constant 0 : index
    %7 = vector.load %arg3[%c104, %c0_6] : memref<400x128xf32, #tpu.memory_space<vmem>>, vector<16x32xf32>
    %cst_7 = arith.constant dense<0.000000e+00> : vector<2x32xf32>
    %8 = tpu.matmul %6, %7, %cst_7 {dimension_numbers = #tpu.dot_dimension_numbers<[1], [0], [0], [1], [0, 0, 1, 1], [], []>} : vector<2x16xf32>, vector<16x32xf32>, vector<2x32xf32> -> vector<2x32xf32>
    %9 = vector.extract_strided_slice %8 {offsets = [0, 0], sizes = [1, 32], strides = [1, 1]} : vector<2x32xf32> to vector<1x32xf32>
    %10 = vector.shape_cast %9 : vector<1x32xf32> to vector<1x32xf32>
    %11 = vector.broadcast %10 : vector<1x32xf32> to vector<8x32xf32>
    %12 = vector.extract_strided_slice %8 {offsets = [1, 0], sizes = [1, 32], strides = [1, 1]} : vector<2x32xf32> to vector<1x32xf32>
    %13 = vector.shape_cast %12 : vector<1x32xf32> to vector<1x32xf32>
    %14 = vector.broadcast %13 : vector<1x32xf32> to vector<8x32xf32>
    %15 = tpu.concatenate %11, %14 in 0 : vector<8x32xf32>, vector<8x32xf32> -> vector<16x32xf32>
    %c72 = arith.constant 72 : index
    %c0_8 = arith.constant 0 : index
    %16 = vector.load %arg3[%c72, %c0_8] : memref<400x128xf32, #tpu.memory_space<vmem>>, vector<32x32xf32>
    %cst_9 = arith.constant dense<0.000000e+00> : vector<16x32xf32>
    %17 = tpu.matmul %5, %16, %cst_9 {dimension_numbers = #tpu.dot_dimension_numbers<[1], [0], [0], [1], [0, 0, 1, 1], [], []>} : vector<16x32xf32>, vector<32x32xf32>, vector<16x32xf32> -> vector<16x32xf32>
    %18 = arith.addf %17, %15 : vector<16x32xf32>
    %c120 = arith.constant 120 : index
    %c0_10 = arith.constant 0 : index
    %19 = vector.load %arg3[%c120, %c0_10] : memref<400x128xf32, #tpu.memory_space<vmem>>, vector<1x32xf32>
    %20 = vector.broadcast %19 : vector<1x32xf32> to vector<16x32xf32>
    %21 = arith.addf %18, %20 : vector<16x32xf32>
    %22 = tpu.iota {dimensions = array<i32: 0>} : vector<16x32xi32>
    %c8_i32 = arith.constant 8 : i32
    %c0_i32 = arith.constant 0 : i32
    %23 = arith.cmpi eq, %c8_i32, %c0_i32 : i32
    %c1_i32 = arith.constant 1 : i32
    %24 = arith.select %23, %c1_i32, %c8_i32 : i32
    %25 = vector.broadcast %24 : i32 to vector<16x32xi32>
    %26 = arith.remsi %22, %25 : vector<16x32xi32>
    %c0_i32_11 = arith.constant 0 : i32
    %27 = vector.broadcast %c0_i32_11 : i32 to vector<16x32xi32>
    %28 = arith.cmpi ne, %26, %27 : vector<16x32xi32>
    %c0_i32_12 = arith.constant 0 : i32
    %29 = vector.broadcast %c0_i32_12 : i32 to vector<16x32xi32>
    %30 = arith.cmpi slt, %26, %29 : vector<16x32xi32>
    %c0_i32_13 = arith.constant 0 : i32
    %31 = arith.cmpi slt, %24, %c0_i32_13 : i32
    %32 = vector.broadcast %31 : i1 to vector<16x32xi1>
    %33 = vector.broadcast %32 : vector<16x32xi1> to vector<16x32xi1>
    %34 = arith.xori %30, %33 : vector<16x32xi1>
    %35 = arith.andi %34, %28 : vector<16x32xi1>
    %36 = vector.broadcast %24 : i32 to vector<16x32xi32>
    %37 = arith.addi %26, %36 : vector<16x32xi32>
    %38 = arith.select %35, %37, %26 : vector<16x32xi1>, vector<16x32xi32>
    %c0_i32_14 = arith.constant 0 : i32
    %39 = vector.broadcast %c0_i32_14 : i32 to vector<16x32xi32>
    %40 = arith.cmpi eq, %38, %39 : vector<16x32xi32>
    %c1_i32_15 = arith.constant 1 : i32
    %41 = tpu.dynamic_rotate %21 by %c1_i32_15 dim 0 : vector<16x32xf32>, i32 -> vector<16x32xf32>
    %cst_16 = arith.constant 0.000000e+00 : f32
    %42 = vector.broadcast %cst_16 : f32 to vector<16x32xf32>
    %43 = arith.select %40, %42, %41 : vector<16x32xi1>, vector<16x32xf32>
    %c7_i32 = arith.constant 7 : i32
    %44 = vector.broadcast %c7_i32 : i32 to vector<16x32xi32>
    %45 = arith.cmpi eq, %38, %44 : vector<16x32xi32>
    %c15_i32 = arith.constant 15 : i32
    %46 = tpu.dynamic_rotate %21 by %c15_i32 dim 0 : vector<16x32xf32>, i32 -> vector<16x32xf32>
    %cst_17 = arith.constant 0.000000e+00 : f32
    %47 = vector.broadcast %cst_17 : f32 to vector<16x32xf32>
    %48 = arith.select %45, %47, %46 : vector<16x32xi1>, vector<16x32xf32>
    %49 = tpu.concatenate %43, %21, %48 in 1 : vector<16x32xf32>, vector<16x32xf32>, vector<16x32xf32> -> vector<16x96xf32>
    %c128 = arith.constant 128 : index
    %c0_18 = arith.constant 0 : index
    %50 = vector.load %arg3[%c128, %c0_18] : memref<400x128xf32, #tpu.memory_space<vmem>>, vector<96x48xf32>
    %cst_19 = arith.constant dense<0.000000e+00> : vector<16x48xf32>
    %51 = tpu.matmul %49, %50, %cst_19 {dimension_numbers = #tpu.dot_dimension_numbers<[1], [0], [0], [1], [0, 0, 1, 1], [], []>} : vector<16x96xf32>, vector<96x48xf32>, vector<16x48xf32> -> vector<16x48xf32>
    %c224 = arith.constant 224 : index
    %c0_20 = arith.constant 0 : index
    %52 = vector.load %arg3[%c224, %c0_20] : memref<400x128xf32, #tpu.memory_space<vmem>>, vector<1x48xf32>
    %53 = vector.broadcast %52 : vector<1x48xf32> to vector<16x48xf32>
    %54 = arith.addf %51, %53 : vector<16x48xf32>
    %cst_21 = arith.constant 0.000000e+00 : f32
    %55 = vector.broadcast %cst_21 : f32 to vector<16x48xf32>
    %56 = arith.maximumf %54, %55 : vector<16x48xf32>
    %c232 = arith.constant 232 : index
    %c0_22 = arith.constant 0 : index
    %57 = vector.load %arg3[%c232, %c0_22] : memref<400x128xf32, #tpu.memory_space<vmem>>, vector<48x128xf32>
    %cst_23 = arith.constant dense<0.000000e+00> : vector<16x128xf32>
    %58 = tpu.matmul %56, %57, %cst_23 {dimension_numbers = #tpu.dot_dimension_numbers<[1], [0], [0], [1], [0, 0, 1, 1], [], []>} : vector<16x48xf32>, vector<48x128xf32>, vector<16x128xf32> -> vector<16x128xf32>
    %c280 = arith.constant 280 : index
    %c0_24 = arith.constant 0 : index
    %59 = vector.load %arg3[%c280, %c0_24] : memref<400x128xf32, #tpu.memory_space<vmem>>, vector<1x128xf32>
    %60 = vector.broadcast %59 : vector<1x128xf32> to vector<16x128xf32>
    %61 = arith.addf %58, %60 : vector<16x128xf32>
    %62 = vector.extract_strided_slice %61 {offsets = [0, 0], sizes = [16, 32], strides = [1, 1]} : vector<16x128xf32> to vector<16x32xf32>
    %c288 = arith.constant 288 : index
    %c0_25 = arith.constant 0 : index
    %63 = vector.load %arg3[%c288, %c0_25] : memref<400x128xf32, #tpu.memory_space<vmem>>, vector<32x64xf32>
    %cst_26 = arith.constant dense<0.000000e+00> : vector<16x64xf32>
    %64 = tpu.matmul %62, %63, %cst_26 {dimension_numbers = #tpu.dot_dimension_numbers<[1], [0], [0], [1], [0, 0, 1, 1], [], []>} : vector<16x32xf32>, vector<32x64xf32>, vector<16x64xf32> -> vector<16x64xf32>
    %c320 = arith.constant 320 : index
    %c0_27 = arith.constant 0 : index
    %65 = vector.load %arg3[%c320, %c0_27] : memref<400x128xf32, #tpu.memory_space<vmem>>, vector<1x64xf32>
    %66 = vector.broadcast %65 : vector<1x64xf32> to vector<16x64xf32>
    %67 = arith.addf %64, %66 : vector<16x64xf32>
    %cst_28 = arith.constant 0.000000e+00 : f32
    %68 = vector.broadcast %cst_28 : f32 to vector<16x64xf32>
    %69 = arith.maximumf %67, %68 : vector<16x64xf32>
    %c328 = arith.constant 328 : index
    %c0_29 = arith.constant 0 : index
    %70 = vector.load %arg3[%c328, %c0_29] : memref<400x128xf32, #tpu.memory_space<vmem>>, vector<64x128xf32>
    %cst_30 = arith.constant dense<0.000000e+00> : vector<16x128xf32>
    %71 = tpu.matmul %69, %70, %cst_30 {dimension_numbers = #tpu.dot_dimension_numbers<[1], [0], [0], [1], [0, 0, 1, 1], [], []>} : vector<16x64xf32>, vector<64x128xf32>, vector<16x128xf32> -> vector<16x128xf32>
    %c392 = arith.constant 392 : index
    %c0_31 = arith.constant 0 : index
    %72 = vector.load %arg3[%c392, %c0_31] : memref<400x128xf32, #tpu.memory_space<vmem>>, vector<1x128xf32>
    %73 = vector.broadcast %72 : vector<1x128xf32> to vector<16x128xf32>
    %74 = arith.addf %71, %73 : vector<16x128xf32>
    %75 = tpu.concatenate %61, %74 in 1 : vector<16x128xf32>, vector<16x128xf32> -> vector<16x256xf32>
    %c0_32 = arith.constant 0 : index
    %c0_33 = arith.constant 0 : index
    %76 = vector.load %arg4[%c0_32, %c0_33] : memref<16x256xf32, #tpu.memory_space<vmem>>, vector<16x256xf32>
    tpu.vector_store %arg4[%c0_32, %c0_33], %75 {strides = array<i32>} : memref<16x256xf32, #tpu.memory_space<vmem>>, vector<16x256xf32>,
    return
  }
  func.func @transform_0(%arg0: i32) -> (i32, i32) {
    %c0_i32 = arith.constant 0 : i32
    %c0_i32_0 = arith.constant 0 : i32
    %c0_i32_1 = arith.constant 0 : i32
    return %c0_i32, %c0_i32_0 : i32, i32
  }
  func.func @transform_1(%arg0: i32) -> (i32, i32) {
    %c0_i32 = arith.constant 0 : i32
    %c0_i32_0 = arith.constant 0 : i32
    %c0_i32_1 = arith.constant 0 : i32
    return %c0_i32, %c0_i32_0 : i32, i32
  }
  func.func @transform_2(%arg0: i32) -> (i32, i32) {
    %c0_i32 = arith.constant 0 : i32
    %c0_i32_0 = arith.constant 0 : i32
    %c0_i32_1 = arith.constant 0 : i32
    return %c0_i32, %c0_i32_0 : i32, i32
  }
  func.func @transform_3(%arg0: i32) -> (i32, i32) {
    %c0_i32 = arith.constant 0 : i32
    %c0_i32_0 = arith.constant 0 : i32
    %c0_i32_1 = arith.constant 0 : i32
    return %c0_i32, %c0_i32_0 : i32, i32
  }
}

</mosaic_0001>

<llo_original>
// kernel: base_hubert_forward.1
$region0: #{base_hubert_forward.1}
  #allocation0 [shape = 'u32[]', space=smem, size = 0x4, offset = 0x4, fixed_abs, tag = 'smem constant byte address 0x4 - core index']
  #allocation1 [shape = 'u32[144,128]{1,0:T(1,128)}', space=vmem, size = 0x12000, scoped, tag = 'internal scratch']
  %s0 = inlined_call_operand.vmem [shape: f32[16,64], index: 0, kind: input, shape index: {}]
  %s1 = inlined_call_operand.vmem [shape: f32[2,16], index: 1, kind: input, shape index: {}]
  %s2 = inlined_call_operand.vmem [shape: f32[400,128], index: 2, kind: input, shape index: {}]
  %s3 = inlined_call_operand.vmem [shape: f32[16,256], index: 3, kind: output, shape index: {}]
  %s4 = sld [smem:[#allocation0]]
  $region22: #{base_hubert_forward.1} parent=0
    _
  %s6 = ssub.s32 1, %s4
  %s7 = scalar_select 0, %s6, %s4
  // Predicated region
  $region2: #{base_hubert_forward.1} parent=0 // pred_check
    _
  $region3: #{base_hubert_forward.1} parent=0 // pred_check_branch
    %9 = sbr.rel (0) target = $region5
  $region4: #{base_hubert_forward.1} parent=0 // pred_region
    _
  $region5: #{base_hubert_forward.1} parent=0 // pred_fallthru
    _
  // Predicated region
  $region6: #{base_hubert_forward.1} parent=0 // pred_check
    _
  $region7: #{base_hubert_forward.1} parent=0 // pred_check_branch
    %11 = sbr.rel (0) target = $region9
  $region8: #{base_hubert_forward.1} parent=0 // pred_region
    _
  $region9: #{base_hubert_forward.1} parent=0 // pred_fallthru
    _
  // Predicated region
  $region10: #{base_hubert_forward.1} parent=0 // pred_check
    _
  $region11: #{base_hubert_forward.1} parent=0 // pred_check_branch
    %13 = sbr.rel (0) target = $region13
  $region12: #{base_hubert_forward.1} parent=0 // pred_region
    _
  $region13: #{base_hubert_forward.1} parent=0 // pred_fallthru
    _
  %v14 = vld [vmem:[%s0] sm:$0xff]
  %v15 = vld [vmem:[%s0 + $0x8] sm:$0xff]
  %v16 = vld [vmem:[%s2] sm:$0xff]
  %v17 = vld [vmem:[%s2 + $0x8] sm:$0xff]
  %v18 = vld [vmem:[%s2 + $0x10] sm:$0xff]
  %v19 = vld [vmem:[%s2 + $0x18] sm:$0xff]
  %v20 = vld [vmem:[%s2 + $0x20] sm:$0xff]
  %v21 = vld [vmem:[%s2 + $0x28] sm:$0xff]
  %v22 = vld [vmem:[%s2 + $0x30] sm:$0xff]
  %v23 = vld [vmem:[%s2 + $0x38] sm:$0xff]
  %v24 = vld [vmem:[%s2 + $0x40] sm:$0x1]
  %v25 = vlaneseq
  %v26 = vshrl.u32 %v25, 7
  %v27 = vsub.s32 0, %v26
  %v28 = vrot.slane %v24, %v27
  %vm29 = vcmask 523264
  %v31 = vsel %vm29, %v14, 0
  %v34 = vsel %vm29, %v15, 0
  %36 = vmatprep.subr.mxu0 0.0
  %37 = vmatpush1.msra.mxu0 %v16
  %38 = vmatprep.subr.mxu0 0.0
  %39 = vmatpush1.msra.mxu0 %v17
  %40 = vmatprep.subr.mxu0 0.0
  %41 = vmatpush1.msra.mxu0 %v18
  %42 = vmatprep.subr.mxu0 0.0
  %43 = vmatpush1.msra.mxu0 %v19
  %44 = vmatprep.subr.mxu0 0.0
  %45 = vmatpush1.msra.mxu0 %v20
  %46 = vmatprep.subr.mxu0 0.0
  %47 = vmatpush1.msra.mxu0 %v21
  %48 = vmatprep.subr.mxu0 0.0
  %49 = vmatpush1.msra.mxu0 %v22
  %50 = vmatprep.subr.mxu0 0.0
  %51 = vmatpush1.msra.mxu0 %v23
  %52 = vmatprep.subr.mxu0 0.0
  %53 = vmatpush1.msra.mxu0 0.0
  %54 = vmatprep.subr.mxu0 0.0
  %55 = vmatpush1.msra.mxu0 0.0
  %56 = vmatprep.subr.mxu0 0.0
  %57 = vmatpush1.msra.mxu0 0.0
  %58 = vmatprep.subr.mxu0 0.0
  %59 = vmatpush1.msra.mxu0 0.0
  %60 = vmatprep.subr.mxu0 0.0
  %61 = vmatpush1.msra.mxu0 0.0
  %62 = vmatprep.subr.mxu0 0.0
  %63 = vmatpush1.msra.mxu0 0.0
  %64 = vmatprep.subr.mxu0 0.0
  %65 = vmatpush1.msra.mxu0 0.0
  %66 = vmatprep.subr.mxu0 0.0
  %67 = vmatpush1.msra.mxu0 0.0
  %68 = vmatprep.subr.mxu0 0.0
  %69 = vmatpush1.msra.mxu0 0.0
  %70 = vmatprep.subr.mxu0 0.0
  %71 = vmatpush1.msra.mxu0 0.0
  %72 = vmatprep.subr.mxu0 0.0
  %73 = vmatpush1.msra.mxu0 0.0
  %74 = vmatprep.subr.mxu0 0.0
  %75 = vmatpush1.msra.mxu0 0.0
  %76 = vmatprep.subr.mxu0 0.0
  %77 = vmatpush1.msra.mxu0 0.0
  %78 = vmatprep.subr.mxu0 0.0
  %79 = vmatpush1.msra.mxu0 0.0
  %80 = vmatprep.subr.mxu0 0.0
  %81 = vmatpush1.msra.mxu0 0.0
  %82 = vmatprep.subr.mxu0 0.0
  %83 = vmatpush1.msra.mxu0 0.0
  %84 = vmatprep.subr.mxu0 0.0
  %85 = vmatpush1.msra.mxu0 0.0
  %86 = vmatprep.subr.mxu0 0.0
  %87 = vmatpush1.msra.mxu0 0.0
  %88 = vmatprep.subr.mxu0 0.0
  %89 = vmatpush1.msra.mxu0 0.0
  %90 = vmatprep.subr.mxu0 0.0
  %91 = vmatpush1.msra.mxu0 0.0
  %92 = vmatprep.subr.mxu0 0.0
  %93 = vmatpush1.msra.mxu0 0.0
  %94 = vmatprep.subr.mxu0 0.0
  %95 = vmatpush1.msra.mxu0 0.0
  %96 = vmatprep.subr.mxu0 0.0
  %97 = vmatpush1.msra.mxu0 0.0
  %98 = vmatprep.subr.mxu0 0.0
  %99 = vmatpush1.msra.mxu0 0.0
  %100 = vmatprep.mubr.f32.mxu0 0.0
  %101 = vmatmul.mubr.f32.gmra.mrb[0].mxu0 %v31
  %v102 = vpop.f32.mrb[0].mxu0
  %v103 = vadd.f32 %v28, %v102
  %v104 = vpop.f32.mrb[0].mxu0
  %105 = vmatprep.mubr.f32.mxu0 0.0
  %106 = vmatmul.mubr.f32.gmra.mrb[0].mxu0 %v34
  %v107 = vpop.f32.mrb[0].mxu0
  %v108 = vadd.f32 %v28, %v107
  %v109 = vpop.f32.mrb[0].mxu0
  %110 = vdwg.mxu0
  %v111 = vld [vmem:[%s1] sm:$0x3]
  %v112 = vld [vmem:[%s2 + $0x68] sm:$0xff]
  %v113 = vld [vmem:[%s2 + $0x70] sm:$0xff]
  %vm114 = vcmask 130048
  %v116 = vsel %vm114, %v111, 0
  %118 = vmatprep.subr.mxu0 0.0
  %119 = vmatpush1.msra.mxu0 %v112
  %120 = vmatprep.subr.mxu0 0.0
  %121 = vmatpush1.msra.mxu0 %v113
  %122 = vmatprep.subr.mxu0 0.0
  %123 = vmatpush1.msra.mxu0 0.0
  %124 = vmatprep.subr.mxu0 0.0
  %125 = vmatpush1.msra.mxu0 0.0
  %126 = vmatprep.subr.mxu0 0.0
  %127 = vmatpush1.msra.mxu0 0.0
  %128 = vmatprep.subr.mxu0 0.0
  %129 = vmatpush1.msra.mxu0 0.0
  %130 = vmatprep.subr.mxu0 0.0
  %131 = vmatpush1.msra.mxu0 0.0
  %132 = vmatprep.subr.mxu0 0.0
  %133 = vmatpush1.msra.mxu0 0.0
  %134 = vmatprep.subr.mxu0 0.0
  %135 = vmatpush1.msra.mxu0 0.0
  %136 = vmatprep.subr.mxu0 0.0
  %137 = vmatpush1.msra.mxu0 0.0
  %138 = vmatprep.subr.mxu0 0.0
  %139 = vmatpush1.msra.mxu0 0.0
  %140 = vmatprep.subr.mxu0 0.0
  %141 = vmatpush1.msra.mxu0 0.0
  %142 = vmatprep.subr.mxu0 0.0
  %143 = vmatpush1.msra.mxu0 0.0
  %144 = vmatprep.subr.mxu0 0.0
  %145 = vmatpush1.msra.mxu0 0.0
  %146 = vmatprep.subr.mxu0 0.0
  %147 = vmatpush1.msra.mxu0 0.0
  %148 = vmatprep.subr.mxu0 0.0
  %149 = vmatpush1.msra.mxu0 0.0
  %150 = vmatprep.subr.mxu0 0.0
  %151 = vmatpush1.msra.mxu0 0.0
  %152 = vmatprep.subr.mxu0 0.0
  %153 = vmatpush1.msra.mxu0 0.0
  %154 = vmatprep.subr.mxu0 0.0
  %155 = vmatpush1.msra.mxu0 0.0
  %156 = vmatprep.subr.mxu0 0.0
  %157 = vmatpush1.msra.mxu0 0.0
  %158 = vmatprep.subr.mxu0 0.0
  %159 = vmatpush1.msra.mxu0 0.0
  %160 = vmatprep.subr.mxu0 0.0
  %161 = vmatpush1.msra.mxu0 0.0
  %162 = vmatprep.subr.mxu0 0.0
  %163 = vmatpush1.msra.mxu0 0.0
  %164 = vmatprep.subr.mxu0 0.0
  %165 = vmatpush1.msra.mxu0 0.0
  %166 = vmatprep.subr.mxu0 0.0
  %167 = vmatpush1.msra.mxu0 0.0
  %168 = vmatprep.subr.mxu0 0.0
  %169 = vmatpush1.msra.mxu0 0.0
  %170 = vmatprep.subr.mxu0 0.0
  %171 = vmatpush1.msra.mxu0 0.0
  %172 = vmatprep.subr.mxu0 0.0
  %173 = vmatpush1.msra.mxu0 0.0
  %174 = vmatprep.subr.mxu0 0.0
  %175 = vmatpush1.msra.mxu0 0.0
  %176 = vmatprep.subr.mxu0 0.0
  %177 = vmatpush1.msra.mxu0 0.0
  %178 = vmatprep.subr.mxu0 0.0
  %179 = vmatpush1.msra.mxu0 0.0
  %180 = vmatprep.subr.mxu0 0.0
  %181 = vmatpush1.msra.mxu0 0.0
  %182 = vmatprep.mubr.f32.mxu0 0.0
  %183 = vmatmul.mubr.f32.gmra.mrb[0].mxu0 %v116
  %v184 = vpop.f32.mrb[0].mxu0
  %v185 = vadd.f32 0.0, %v184
  %v186 = vpop.f32.mrb[0].mxu0
  %187 = vdwg.mxu0
  %v188 = vlaneseq
  %v189 = vshrl.u32 %v188, 7
  %v190 = vsub.s32 0, %v189
  %v191 = vrot.slane %v185, %v190
  %v192 = vlaneseq
  %v193 = vshrl.u32 %v192, 7
  %v194 = vsub.s32 1, %v193
  %v195 = vrot.slane %v185, %v194
  %v196 = vld [vmem:[%s2 + $0x48] sm:$0xff]
  %v197 = vld [vmem:[%s2 + $0x50] sm:$0xff]
  %v198 = vld [vmem:[%s2 + $0x58] sm:$0xff]
  %v199 = vld [vmem:[%s2 + $0x60] sm:$0xff]
  %vm200 = vcmask 261120
  %v202 = vsel %vm200, %v103, 0
  %v205 = vsel %vm200, %v108, 0
  %207 = vmatprep.subr.mxu0 0.0
  %208 = vmatpush1.msra.mxu0 %v196
  %209 = vmatprep.subr.mxu0 0.0
  %210 = vmatpush1.msra.mxu0 %v197
  %211 = vmatprep.subr.mxu0 0.0
  %212 = vmatpush1.msra.mxu0 %v198
  %213 = vmatprep.subr.mxu0 0.0
  %214 = vmatpush1.msra.mxu0 %v199
  %215 = vmatprep.subr.mxu0 0.0
  %216 = vmatpush1.msra.mxu0 0.0
  %217 = vmatprep.subr.mxu0 0.0
  %218 = vmatpush1.msra.mxu0 0.0
  %219 = vmatprep.subr.mxu0 0.0
  %220 = vmatpush1.msra.mxu0 0.0
  %221 = vmatprep.subr.mxu0 0.0
  %222 = vmatpush1.msra.mxu0 0.0
  %223 = vmatprep.subr.mxu0 0.0
  %224 = vmatpush1.msra.mxu0 0.0
  %225 = vmatprep.subr.mxu0 0.0
  %226 = vmatpush1.msra.mxu0 0.0
  %227 = vmatprep.subr.mxu0 0.0
  %228 = vmatpush1.msra.mxu0 0.0
  %229 = vmatprep.subr.mxu0 0.0
  %230 = vmatpush1.msra.mxu0 0.0
  %231 = vmatprep.subr.mxu0 0.0
  %232 = vmatpush1.msra.mxu0 0.0
  %233 = vmatprep.subr.mxu0 0.0
  %234 = vmatpush1.msra.mxu0 0.0
  %235 = vmatprep.subr.mxu0 0.0
  %236 = vmatpush1.msra.mxu0 0.0
  %237 = vmatprep.subr.mxu0 0.0
  %238 = vmatpush1.msra.mxu0 0.0
  %239 = vmatprep.subr.mxu0 0.0
  %240 = vmatpush1.msra.mxu0 0.0
  %241 = vmatprep.subr.mxu0 0.0
  %242 = vmatpush1.msra.mxu0 0.0
  %243 = vmatprep.subr.mxu0 0.0
  %244 = vmatpush1.msra.mxu0 0.0
  %245 = vmatprep.subr.mxu0 0.0
  %246 = vmatpush1.msra.mxu0 0.0
  %247 = vmatprep.subr.mxu0 0.0
  %248 = vmatpush1.msra.mxu0 0.0
  %249 = vmatprep.subr.mxu0 0.0
  %250 = vmatpush1.msra.mxu0 0.0
  %251 = vmatprep.subr.mxu0 0.0
  %252 = vmatpush1.msra.mxu0 0.0
  %253 = vmatprep.subr.mxu0 0.0
  %254 = vmatpush1.msra.mxu0 0.0
  %255 = vmatprep.subr.mxu0 0.0
  %256 = vmatpush1.msra.mxu0 0.0
  %257 = vmatprep.subr.mxu0 0.0
  %258 = vmatpush1.msra.mxu0 0.0
  %259 = vmatprep.subr.mxu0 0.0
  %260 = vmatpush1.msra.mxu0 0.0
  %261 = vmatprep.subr.mxu0 0.0
  %262 = vmatpush1.msra.mxu0 0.0
  %263 = vmatprep.subr.mxu0 0.0
  %264 = vmatpush1.msra.mxu0 0.0
  %265 = vmatprep.subr.mxu0 0.0
  %266 = vmatpush1.msra.mxu0 0.0
  %267 = vmatprep.subr.mxu0 0.0
  %268 = vmatpush1.msra.mxu0 0.0
  %269 = vmatprep.subr.mxu0 0.0
  %270 = vmatpush1.msra.mxu0 0.0
  %271 = vmatprep.mubr.f32.mxu0 0.0
  %272 = vmatmul.mubr.f32.gmra.mrb[0].mxu0 %v202
  %v273 = vpop.f32.mrb[0].mxu0
  %v274 = vadd.f32 %v191, %v273
  %v275 = vpop.f32.mrb[0].mxu0
  %276 = vmatprep.mubr.f32.mxu0 0.0
  %277 = vmatmul.mubr.f32.gmra.mrb[0].mxu0 %v205
  %v278 = vpop.f32.mrb[0].mxu0
  %v279 = vadd.f32 %v195, %v278
  %v280 = vpop.f32.mrb[0].mxu0
  %281 = vdwg.mxu0
  %v282 = vld [vmem:[%s2 + $0x78] sm:$0x1]
  %v283 = vlaneseq
  %v284 = vshrl.u32 %v283, 7
  %v285 = vsub.s32 0, %v284
  %v286 = vrot.slane %v282, %v285
  %v287 = vadd.f32 %v274, %v286
  %v288 = vadd.f32 %v279, %v286
  %v289 = vlaneseq
  %v290 = vshrl.u32 %v289, 7
  %v291 = vadd.s32 %v290, 8
  %vm292 = vcmp.lt.s32.totalorder %v290, 0
  %v293 = vsub.s32 0, %v290
  %v294 = vsel %vm292, %v293, %v290
  %v295 = vshrl.u32 %v294, 3
  %v296 = vand.u32 %v294, 7
  %v297 = vsub.s32 0, %v296
  %v298 = vsel %vm292, %v297, %v296
  %vm299 = vcmp.lt.s32.totalorder %v291, 0
  %v300 = vsub.s32 0, %v291
  %v301 = vsel %vm299, %v300, %v291
  %v302 = vshrl.u32 %v301, 3
  %v303 = vand.u32 %v301, 7
  %v304 = vsub.s32 0, %v303
  %v305 = vsel %vm299, %v304, %v303
  %vm306 = vcmp.ne.s32.totalorder %v298, 0
  %vm307 = vcmp.ne.s32.totalorder %v305, 0
  %vm308 = vcmp.lt.s32.totalorder %v298, 0
  %vm309 = vcmp.lt.s32.totalorder %v305, 0
  %vm310 = vmand %vm308, %vm306
  %vm311 = vmand %vm309, %vm307
  %v312 = vadd.s32 %v298, 8
  %v313 = vadd.s32 %v305, 8
  %v314 = vsel %vm310, %v312, %v298
  %v315 = vsel %vm311, %v313, %v305
  %vm316 = vcmp.eq.s32.totalorder %v314, 0
  %vm317 = vcmp.eq.s32.totalorder %v315, 0
  %v318 = vrot.slane %v287, 7
  %v319 = vrot.slane %v288, 7
  %vm320 = vcmp.lt.s32.totalorder %v290, 1
  %v321 = vsel %vm320, %v318, %v319
  %v322 = vsel %vm320, %v319, %v318
  %v323 = vsel %vm316, 0.0, %v322
  %v324 = vsel %vm317, 0.0, %v321
  %vm325 = vcmp.eq.s32.totalorder %v314, 7
  %vm326 = vcmp.eq.s32.totalorder %v315, 7
  %v327 = vrot.slane %v287, 1
  %v328 = vrot.slane %v288, 1
  %vm329 = vcmp.lt.s32.totalorder %v290, 7
  %v330 = vsel %vm329, %v327, %v328
  %v331 = vsel %vm329, %v328, %v327
  %v332 = vsel %vm325, 0.0, %v330
  %v333 = vsel %vm326, 0.0, %v331
  %336 = vrot.lane.b32.xlu0 %v287, 32
  %v337 = vpop.permute.xlu0 %336
  %338 = vrot.lane.b32.xlu0 %v288, 32
  %v339 = vpop.permute.xlu0 %338
  %344 = vrot.lane.b32.xlu0 %v332, 64
  %v345 = vpop.permute.xlu0 %344
  %346 = vrot.lane.b32.xlu0 %v333, 64
  %v347 = vpop.permute.xlu0 %346
  %v350 = vsel %vm200, %v323, %v337
  %v351 = vsel %vm200, %v324, %v339
  %v352 = vsel %vm29, %v350, %v345
  %v353 = vsel %vm29, %v351, %v347
  %v354 = vld [vmem:[%s2 + $0x80] sm:$0xff]
  %v355 = vld [vmem:[%s2 + $0x88] sm:$0xff]
  %v356 = vld [vmem:[%s2 + $0x90] sm:$0xff]
  %v357 = vld [vmem:[%s2 + $0x98] sm:$0xff]
  %v358 = vld [vmem:[%s2 + $0xa0] sm:$0xff]
  %v359 = vld [vmem:[%s2 + $0xa8] sm:$0xff]
  %v360 = vld [vmem:[%s2 + $0xb0] sm:$0xff]
  %v361 = vld [vmem:[%s2 + $0xb8] sm:$0xff]
  %v362 = vld [vmem:[%s2 + $0xc0] sm:$0xff]
  %v363 = vld [vmem:[%s2 + $0xc8] sm:$0xff]
  %v364 = vld [vmem:[%s2 + $0xd0] sm:$0xff]
  %v365 = vld [vmem:[%s2 + $0xd8] sm:$0xff]
  %v366 = vld [vmem:[%s2 + $0xe0] sm:$0x1]
  %v367 = vlaneseq
  %v368 = vshrl.u32 %v367, 7
  %v369 = vsub.s32 0, %v368
  %v370 = vrot.slane %v366, %v369
  %vm371 = vcmask 785408
  %v373 = vsel %vm371, %v352, 0
  %v376 = vsel %vm371, %v353, 0
  %378 = vmatprep.subr.mxu0 0.0
  %379 = vmatpush1.msra.mxu0 %v354
  %380 = vmatprep.subr.mxu0 0.0
  %381 = vmatpush1.msra.mxu0 %v355
  %382 = vmatprep.subr.mxu0 0.0
  %383 = vmatpush1.msra.mxu0 %v356
  %384 = vmatprep.subr.mxu0 0.0
  %385 = vmatpush1.msra.mxu0 %v357
  %386 = vmatprep.subr.mxu0 0.0
  %387 = vmatpush1.msra.mxu0 %v358
  %388 = vmatprep.subr.mxu0 0.0
  %389 = vmatpush1.msra.mxu0 %v359
  %390 = vmatprep.subr.mxu0 0.0
  %391 = vmatpush1.msra.mxu0 %v360
  %392 = vmatprep.subr.mxu0 0.0
  %393 = vmatpush1.msra.mxu0 %v361
  %394 = vmatprep.subr.mxu0 0.0
  %395 = vmatpush1.msra.mxu0 %v362
  %396 = vmatprep.subr.mxu0 0.0
  %397 = vmatpush1.msra.mxu0 %v363
  %398 = vmatprep.subr.mxu0 0.0
  %399 = vmatpush1.msra.mxu0 %v364
  %400 = vmatprep.subr.mxu0 0.0
  %401 = vmatpush1.msra.mxu0 %v365
  %402 = vmatprep.subr.mxu0 0.0
  %403 = vmatpush1.msra.mxu0 0.0
  %404 = vmatprep.subr.mxu0 0.0
  %405 = vmatpush1.msra.mxu0 0.0
  %406 = vmatprep.subr.mxu0 0.0
  %407 = vmatpush1.msra.mxu0 0.0
  %408 = vmatprep.subr.mxu0 0.0
  %409 = vmatpush1.msra.mxu0 0.0
  %410 = vmatprep.subr.mxu0 0.0
  %411 = vmatpush1.msra.mxu0 0.0
  %412 = vmatprep.subr.mxu0 0.0
  %413 = vmatpush1.msra.mxu0 0.0
  %414 = vmatprep.subr.mxu0 0.0
  %415 = vmatpush1.msra.mxu0 0.0
  %416 = vmatprep.subr.mxu0 0.0
  %417 = vmatpush1.msra.mxu0 0.0
  %418 = vmatprep.subr.mxu0 0.0
  %419 = vmatpush1.msra.mxu0 0.0
  %420 = vmatprep.subr.mxu0 0.0
  %421 = vmatpush1.msra.mxu0 0.0
  %422 = vmatprep.subr.mxu0 0.0
  %423 = vmatpush1.msra.mxu0 0.0
  %424 = vmatprep.subr.mxu0 0.0
  %425 = vmatpush1.msra.mxu0 0.0
  %426 = vmatprep.subr.mxu0 0.0
  %427 = vmatpush1.msra.mxu0 0.0
  %428 = vmatprep.subr.mxu0 0.0
  %429 = vmatpush1.msra.mxu0 0.0
  %430 = vmatprep.subr.mxu0 0.0
  %431 = vmatpush1.msra.mxu0 0.0
  %432 = vmatprep.subr.mxu0 0.0
  %433 = vmatpush1.msra.mxu0 0.0
  %434 = vmatprep.subr.mxu0 0.0
  %435 = vmatpush1.msra.mxu0 0.0
  %436 = vmatprep.subr.mxu0 0.0
  %437 = vmatpush1.msra.mxu0 0.0
  %438 = vmatprep.subr.mxu0 0.0
  %439 = vmatpush1.msra.mxu0 0.0
  %440 = vmatprep.subr.mxu0 0.0
  %441 = vmatpush1.msra.mxu0 0.0
  %442 = vmatprep.mubr.f32.mxu0 0.0
  %443 = vmatmul.mubr.f32.gmra.mrb[0].mxu0 %v373
  %v444 = vpop.f32.mrb[0].mxu0
  %v445 = vadd.f32 %v370, %v444
  %v446 = vpop.f32.mrb[0].mxu0
  %447 = vmatprep.mubr.f32.mxu0 0.0
  %448 = vmatmul.mubr.f32.gmra.mrb[0].mxu0 %v376
  %v449 = vpop.f32.mrb[0].mxu0
  %v450 = vadd.f32 %v370, %v449
  %v451 = vpop.f32.mrb[0].mxu0
  %452 = vdwg.mxu0
  %v453 = vmax.f32 %v445, 0.0
  %v454 = vmax.f32 %v450, 0.0
  %v455 = vld [vmem:[%s2 + $0xe8] sm:$0xff]
  %v456 = vld [vmem:[%s2 + $0xf0] sm:$0xff]
  %v457 = vld [vmem:[%s2 + $0xf8] sm:$0xff]
  %v458 = vld [vmem:[%s2 + $0x100] sm:$0xff]
  %v459 = vld [vmem:[%s2 + $0x108] sm:$0xff]
  %v460 = vld [vmem:[%s2 + $0x110] sm:$0xff]
  %v461 = vld [vmem:[%s2 + $0x118] sm:$0x1]
  %v462 = vlaneseq
  %v463 = vshrl.u32 %v462, 7
  %v464 = vsub.s32 0, %v463
  %v465 = vrot.slane %v461, %v464
  %vm466 = vcmask 392192
  %v468 = vsel %vm466, %v453, 0
  %v471 = vsel %vm466, %v454, 0
  %473 = vmatprep.subr.mxu0 0.0
  %474 = vmatpush1.msra.mxu0 %v455
  %475 = vmatprep.subr.mxu0 0.0
  %476 = vmatpush1.msra.mxu0 %v456
  %477 = vmatprep.subr.mxu0 0.0
  %478 = vmatpush1.msra.mxu0 %v457
  %479 = vmatprep.subr.mxu0 0.0
  %480 = vmatpush1.msra.mxu0 %v458
  %481 = vmatprep.subr.mxu0 0.0
  %482 = vmatpush1.msra.mxu0 %v459
  %483 = vmatprep.subr.mxu0 0.0
  %484 = vmatpush1.msra.mxu0 %v460
  %485 = vmatprep.subr.mxu0 0.0
  %486 = vmatpush1.msra.mxu0 0.0
  %487 = vmatprep.subr.mxu0 0.0
  %488 = vmatpush1.msra.mxu0 0.0
  %489 = vmatprep.subr.mxu0 0.0
  %490 = vmatpush1.msra.mxu0 0.0
  %491 = vmatprep.subr.mxu0 0.0
  %492 = vmatpush1.msra.mxu0 0.0
  %493 = vmatprep.subr.mxu0 0.0
  %494 = vmatpush1.msra.mxu0 0.0
  %495 = vmatprep.subr.mxu0 0.0
  %496 = vmatpush1.msra.mxu0 0.0
  %497 = vmatprep.subr.mxu0 0.0
  %498 = vmatpush1.msra.mxu0 0.0
  %499 = vmatprep.subr.mxu0 0.0
  %500 = vmatpush1.msra.mxu0 0.0
  %501 = vmatprep.subr.mxu0 0.0
  %502 = vmatpush1.msra.mxu0 0.0
  %503 = vmatprep.subr.mxu0 0.0
  %504 = vmatpush1.msra.mxu0 0.0
  %505 = vmatprep.subr.mxu0 0.0
  %506 = vmatpush1.msra.mxu0 0.0
  %507 = vmatprep.subr.mxu0 0.0
  %508 = vmatpush1.msra.mxu0 0.0
  %509 = vmatprep.subr.mxu0 0.0
  %510 = vmatpush1.msra.mxu0 0.0
  %511 = vmatprep.subr.mxu0 0.0
  %512 = vmatpush1.msra.mxu0 0.0
  %513 = vmatprep.subr.mxu0 0.0
  %514 = vmatpush1.msra.mxu0 0.0
  %515 = vmatprep.subr.mxu0 0.0
  %516 = vmatpush1.msra.mxu0 0.0
  %517 = vmatprep.subr.mxu0 0.0
  %518 = vmatpush1.msra.mxu0 0.0
  %519 = vmatprep.subr.mxu0 0.0
  %520 = vmatpush1.msra.mxu0 0.0
  %521 = vmatprep.subr.mxu0 0.0
  %522 = vmatpush1.msra.mxu0 0.0
  %523 = vmatprep.subr.mxu0 0.0
  %524 = vmatpush1.msra.mxu0 0.0
  %525 = vmatprep.subr.mxu0 0.0
  %526 = vmatpush1.msra.mxu0 0.0
  %527 = vmatprep.subr.mxu0 0.0
  %528 = vmatpush1.msra.mxu0 0.0
  %529 = vmatprep.subr.mxu0 0.0
  %530 = vmatpush1.msra.mxu0 0.0
  %531 = vmatprep.subr.mxu0 0.0
  %532 = vmatpush1.msra.mxu0 0.0
  %533 = vmatprep.subr.mxu0 0.0
  %534 = vmatpush1.msra.mxu0 0.0
  %535 = vmatprep.subr.mxu0 0.0
  %536 = vmatpush1.msra.mxu0 0.0
  %537 = vmatprep.mubr.f32.mxu0 0.0
  %538 = vmatmul.mubr.f32.gmra.mrb[0].mxu0 %v468
  %v539 = vpop.f32.mrb[0].mxu0
  %v540 = vadd.f32 %v465, %v539
  %v541 = vpop.f32.mrb[0].mxu0
  %542 = vmatprep.mubr.f32.mxu0 0.0
  %543 = vmatmul.mubr.f32.gmra.mrb[0].mxu0 %v471
  %v544 = vpop.f32.mrb[0].mxu0
  %v545 = vadd.f32 %v465, %v544
  %v546 = vpop.f32.mrb[0].mxu0
  %547 = vdwg.mxu0
  %v548 = vld [vmem:[%s2 + $0x120] sm:$0xff]
  %v549 = vld [vmem:[%s2 + $0x128] sm:$0xff]
  %v550 = vld [vmem:[%s2 + $0x130] sm:$0xff]
  %v551 = vld [vmem:[%s2 + $0x138] sm:$0xff]
  %v552 = vld [vmem:[%s2 + $0x140] sm:$0x1]
  %v553 = vlaneseq
  %v554 = vshrl.u32 %v553, 7
  %v555 = vsub.s32 0, %v554
  %v556 = vrot.slane %v552, %v555
  %v558 = vsel %vm200, %v540, 0
  %v561 = vsel %vm200, %v545, 0
  %563 = vmatprep.subr.mxu0 0.0
  %564 = vmatpush1.msra.mxu0 %v548
  %565 = vmatprep.subr.mxu0 0.0
  %566 = vmatpush1.msra.mxu0 %v549
  %567 = vmatprep.subr.mxu0 0.0
  %568 = vmatpush1.msra.mxu0 %v550
  %569 = vmatprep.subr.mxu0 0.0
  %570 = vmatpush1.msra.mxu0 %v551
  %571 = vmatprep.subr.mxu0 0.0
  %572 = vmatpush1.msra.mxu0 0.0
  %573 = vmatprep.subr.mxu0 0.0
  %574 = vmatpush1.msra.mxu0 0.0
  %575 = vmatprep.subr.mxu0 0.0
  %576 = vmatpush1.msra.mxu0 0.0
  %577 = vmatprep.subr.mxu0 0.0
  %578 = vmatpush1.msra.mxu0 0.0
  %579 = vmatprep.subr.mxu0 0.0
  %580 = vmatpush1.msra.mxu0 0.0
  %581 = vmatprep.subr.mxu0 0.0
  %582 = vmatpush1.msra.mxu0 0.0
  %583 = vmatprep.subr.mxu0 0.0
  %584 = vmatpush1.msra.mxu0 0.0
  %585 = vmatprep.subr.mxu0 0.0
  %586 = vmatpush1.msra.mxu0 0.0
  %587 = vmatprep.subr.mxu0 0.0
  %588 = vmatpush1.msra.mxu0 0.0
  %589 = vmatprep.subr.mxu0 0.0
  %590 = vmatpush1.msra.mxu0 0.0
  %591 = vmatprep.subr.mxu0 0.0
  %592 = vmatpush1.msra.mxu0 0.0
  %593 = vmatprep.subr.mxu0 0.0
  %594 = vmatpush1.msra.mxu0 0.0
  %595 = vmatprep.subr.mxu0 0.0
  %596 = vmatpush1.msra.mxu0 0.0
  %597 = vmatprep.subr.mxu0 0.0
  %598 = vmatpush1.msra.mxu0 0.0
  %599 = vmatprep.subr.mxu0 0.0
  %600 = vmatpush1.msra.mxu0 0.0
  %601 = vmatprep.subr.mxu0 0.0
  %602 = vmatpush1.msra.mxu0 0.0
  %603 = vmatprep.subr.mxu0 0.0
  %604 = vmatpush1.msra.mxu0 0.0
  %605 = vmatprep.subr.mxu0 0.0
  %606 = vmatpush1.msra.mxu0 0.0
  %607 = vmatprep.subr.mxu0 0.0
  %608 = vmatpush1.msra.mxu0 0.0
  %609 = vmatprep.subr.mxu0 0.0
  %610 = vmatpush1.msra.mxu0 0.0
  %611 = vmatprep.subr.mxu0 0.0
  %612 = vmatpush1.msra.mxu0 0.0
  %613 = vmatprep.subr.mxu0 0.0
  %614 = vmatpush1.msra.mxu0 0.0
  %615 = vmatprep.subr.mxu0 0.0
  %616 = vmatpush1.msra.mxu0 0.0
  %617 = vmatprep.subr.mxu0 0.0
  %618 = vmatpush1.msra.mxu0 0.0
  %619 = vmatprep.subr.mxu0 0.0
  %620 = vmatpush1.msra.mxu0 0.0
  %621 = vmatprep.subr.mxu0 0.0
  %622 = vmatpush1.msra.mxu0 0.0
  %623 = vmatprep.subr.mxu0 0.0
  %624 = vmatpush1.msra.mxu0 0.0
  %625 = vmatprep.subr.mxu0 0.0
  %626 = vmatpush1.msra.mxu0 0.0
  %627 = vmatprep.mubr.f32.mxu0 0.0
  %628 = vmatmul.mubr.f32.gmra.mrb[0].mxu0 %v558
  %v629 = vpop.f32.mrb[0].mxu0
  %v630 = vadd.f32 %v556, %v629
  %v631 = vpop.f32.mrb[0].mxu0
  %632 = vmatprep.mubr.f32.mxu0 0.0
  %633 = vmatmul.mubr.f32.gmra.mrb[0].mxu0 %v561
  %v634 = vpop.f32.mrb[0].mxu0
  %v635 = vadd.f32 %v556, %v634
  %v636 = vpop.f32.mrb[0].mxu0
  %637 = vdwg.mxu0
  %v638 = vmax.f32 %v630, 0.0
  %v639 = vmax.f32 %v635, 0.0
  %v640 = vld [vmem:[%s2 + $0x148] sm:$0xff]
  %v641 = vld [vmem:[%s2 + $0x150] sm:$0xff]
  %v642 = vld [vmem:[%s2 + $0x158] sm:$0xff]
  %v643 = vld [vmem:[%s2 + $0x160] sm:$0xff]
  %v644 = vld [vmem:[%s2 + $0x168] sm:$0xff]
  %v645 = vld [vmem:[%s2 + $0x170] sm:$0xff]
  %v646 = vld [vmem:[%s2 + $0x178] sm:$0xff]
  %v647 = vld [vmem:[%s2 + $0x180] sm:$0xff]
  %v648 = vld [vmem:[%s2 + $0x188] sm:$0x1]
  %v649 = vlaneseq
  %v650 = vshrl.u32 %v649, 7
  %v651 = vsub.s32 0, %v650
  %v652 = vrot.slane %v648, %v651
  %v654 = vsel %vm29, %v638, 0
  %v657 = vsel %vm29, %v639, 0
  %659 = vmatprep.subr.mxu0 0.0
  %660 = vmatpush1.msra.mxu0 %v640
  %661 = vmatprep.subr.mxu0 0.0
  %662 = vmatpush1.msra.mxu0 %v641
  %663 = vmatprep.subr.mxu0 0.0
  %664 = vmatpush1.msra.mxu0 %v642
  %665 = vmatprep.subr.mxu0 0.0
  %666 = vmatpush1.msra.mxu0 %v643
  %667 = vmatprep.subr.mxu0 0.0
  %668 = vmatpush1.msra.mxu0 %v644
  %669 = vmatprep.subr.mxu0 0.0
  %670 = vmatpush1.msra.mxu0 %v645
  %671 = vmatprep.subr.mxu0 0.0
  %672 = vmatpush1.msra.mxu0 %v646
  %673 = vmatprep.subr.mxu0 0.0
  %674 = vmatpush1.msra.mxu0 %v647
  %675 = vmatprep.subr.mxu0 0.0
  %676 = vmatpush1.msra.mxu0 0.0
  %677 = vmatprep.subr.mxu0 0.0
  %678 = vmatpush1.msra.mxu0 0.0
  %679 = vmatprep.subr.mxu0 0.0
  %680 = vmatpush1.msra.mxu0 0.0
  %681 = vmatprep.subr.mxu0 0.0
  %682 = vmatpush1.msra.mxu0 0.0
  %683 = vmatprep.subr.mxu0 0.0
  %684 = vmatpush1.msra.mxu0 0.0
  %685 = vmatprep.subr.mxu0 0.0
  %686 = vmatpush1.msra.mxu0 0.0
  %687 = vmatprep.subr.mxu0 0.0
  %688 = vmatpush1.msra.mxu0 0.0
  %689 = vmatprep.subr.mxu0 0.0
  %690 = vmatpush1.msra.mxu0 0.0
  %691 = vmatprep.subr.mxu0 0.0
  %692 = vmatpush1.msra.mxu0 0.0
  %693 = vmatprep.subr.mxu0 0.0
  %694 = vmatpush1.msra.mxu0 0.0
  %695 = vmatprep.subr.mxu0 0.0
  %696 = vmatpush1.msra.mxu0 0.0
  %697 = vmatprep.subr.mxu0 0.0
  %698 = vmatpush1.msra.mxu0 0.0
  %699 = vmatprep.subr.mxu0 0.0
  %700 = vmatpush1.msra.mxu0 0.0
  %701 = vmatprep.subr.mxu0 0.0
  %702 = vmatpush1.msra.mxu0 0.0
  %703 = vmatprep.subr.mxu0 0.0
  %704 = vmatpush1.msra.mxu0 0.0
  %705 = vmatprep.subr.mxu0 0.0
  %706 = vmatpush1.msra.mxu0 0.0
  %707 = vmatprep.subr.mxu0 0.0
  %708 = vmatpush1.msra.mxu0 0.0
  %709 = vmatprep.subr.mxu0 0.0
  %710 = vmatpush1.msra.mxu0 0.0
  %711 = vmatprep.subr.mxu0 0.0
  %712 = vmatpush1.msra.mxu0 0.0
  %713 = vmatprep.subr.mxu0 0.0
  %714 = vmatpush1.msra.mxu0 0.0
  %715 = vmatprep.subr.mxu0 0.0
  %716 = vmatpush1.msra.mxu0 0.0
  %717 = vmatprep.subr.mxu0 0.0
  %718 = vmatpush1.msra.mxu0 0.0
  %719 = vmatprep.subr.mxu0 0.0
  %720 = vmatpush1.msra.mxu0 0.0
  %721 = vmatprep.subr.mxu0 0.0
  %722 = vmatpush1.msra.mxu0 0.0
  %723 = vmatprep.mubr.f32.mxu0 0.0
  %724 = vmatmul.mubr.f32.gmra.mrb[0].mxu0 %v654
  %v725 = vpop.f32.mrb[0].mxu0
  %v726 = vadd.f32 %v652, %v725
  %v727 = vpop.f32.mrb[0].mxu0
  %728 = vmatprep.mubr.f32.mxu0 0.0
  %729 = vmatmul.mubr.f32.gmra.mrb[0].mxu0 %v657
  %v730 = vpop.f32.mrb[0].mxu0
  %v731 = vadd.f32 %v652, %v730
  %v732 = vpop.f32.mrb[0].mxu0
  %733 = vdwg.mxu0
  %734 = vst [vmem:[%s3] sm:$0xff] %v540
  %735 = vst [vmem:[%s3 + $0x8] sm:$0xff] %v726
  %736 = vst [vmem:[%s3 + $0x10] sm:$0xff] %v545
  %737 = vst [vmem:[%s3 + $0x18] sm:$0xff] %v731
  // Predicated region
  $region14: #{base_hubert_forward.1} parent=0 // pred_check
    _
  $region15: #{base_hubert_forward.1} parent=0 // pred_check_branch
    %739 = sbr.rel (0) target = $region17
  $region16: #{base_hubert_forward.1} parent=0 // pred_region
    _
  $region17: #{base_hubert_forward.1} parent=0 // pred_fallthru
    _
  // Predicated region
  $region18: #{base_hubert_forward.1} parent=0 // pred_check
    _
  $region19: #{base_hubert_forward.1} parent=0 // pred_check_branch
    %741 = sbr.rel (0) target = $region21
  $region20: #{base_hubert_forward.1} parent=0 // pred_region
    _
  $region21: #{base_hubert_forward.1} parent=0 // pred_fallthru
    _

</llo_original>
